<compile_context>
chip_gen: v6e
topology: v6e:2x2x1
jax: 0.10.0
libtpu: 0.0.40
codegen_flags: <defaults>
</compile_context>

<pallas_src>
import numpy as np
import jax
import jax.numpy as jnp
from jax.experimental import pallas as pl
from jax.experimental.pallas import tpu as pltpu

IN_FEATURES = 32
HIDDEN = 128            # hidden_features (mlp_ratio = 4)
OUT_FEATURES = IN_FEATURES
BLOCK_ROWS = 128        # row tile: fills a full MXU pass, divisible by 8
_SQRT_2_OVER_PI = 0.7978845608028654


def _mlp_kernel(x_ref, w1_ref, b1_ref, w2_ref, b2_ref, o_ref):
    x = x_ref[...]                                              # (TM, C_in)
    h = jnp.dot(x, w1_ref[...],
                preferred_element_type=jnp.float32) + b1_ref[...]
    # tanh-approximate GELU (EUP tanh; differs from exact erf-GELU by <~1e-3).
    h = 0.5 * h * (1.0 + jnp.tanh(_SQRT_2_OVER_PI *
                                  (h + 0.044715 * h * h * h)))
    # drop1 / drop2 are identity (p = 0.0 / eval mode).
    y = jnp.dot(h, w2_ref[...],
                preferred_element_type=jnp.float32) + b2_ref[...]
    o_ref[...] = y.astype(o_ref.dtype)


def mlp_forward(x, w1, b1, w2, b2, *, block_rows=BLOCK_ROWS):
    """x: (..., in_features); w1: (hidden, in), w2: (out, hidden) (torch layout)."""
    c_in = x.shape[-1]
    c_out = w2.shape[0]
    x2d = x.reshape(-1, c_in)
    m = x2d.shape[0]

    # Pad the row count so it tiles evenly; the pad rows are sliced off after.
    m_pad = pl.cdiv(m, block_rows) * block_rows
    if m_pad != m:
        x2d = jnp.pad(x2d, ((0, m_pad - m), (0, 0)))

    out = pl.pallas_call(
        _mlp_kernel,
        out_shape=jax.ShapeDtypeStruct((m_pad, c_out), x.dtype),
        grid=(m_pad // block_rows,),
        in_specs=[
            pl.BlockSpec((block_rows, c_in), lambda i: (i, 0)),
            # Weights / biases: whole-array, resident in VMEM (no per-step DMA).
            pl.BlockSpec(memory_space=pltpu.MemorySpace.VMEM),
            pl.BlockSpec(memory_space=pltpu.MemorySpace.VMEM),
            pl.BlockSpec(memory_space=pltpu.MemorySpace.VMEM),
            pl.BlockSpec(memory_space=pltpu.MemorySpace.VMEM),
        ],
        out_specs=pl.BlockSpec((block_rows, c_out), lambda i: (i, 0)),
        compiler_params=pltpu.CompilerParams(
            dimension_semantics=("parallel",)),   # row tiles are independent
    )(x2d, w1.T, b1.reshape(1, -1), w2.T, b2.reshape(1, -1))

    return out[:m].reshape(*x.shape[:-1], c_out)


def reference_mlp(x, w1, b1, w2, b2):
    # Exact PyTorch semantics: fc1 -> nn.GELU() (erf-based) -> fc2, drop p=0.
    h = jax.nn.gelu(x @ w1.T + b1, approximate=False)
    return h @ w2.T + b2


if __name__ == "__main__":
    key = jax.random.PRNGKey(0)
    kx, k1, k2, k3, k4 = jax.random.split(key, 5)

    # Small token slab: batch=2, 64 tokens, channels=32, hidden=128.
    x = jax.random.normal(kx, (2, 64, IN_FEATURES), jnp.float32)
    w1 = 0.05 * jax.random.normal(k1, (HIDDEN, IN_FEATURES), jnp.float32)
    b1 = 0.05 * jax.random.normal(k2, (HIDDEN,), jnp.float32)
    w2 = 0.05 * jax.random.normal(k3, (OUT_FEATURES, HIDDEN), jnp.float32)
    b2 = 0.05 * jax.random.normal(k4, (OUT_FEATURES,), jnp.float32)

    out = mlp_forward(x, w1, b1, w2, b2)
    out = jax.block_until_ready(out)

    ref = reference_mlp(x, w1, b1, w2, b2)
    # Tolerance covers default-precision f32 MXU passes (both paths) plus the
    # tanh-vs-erf GELU approximation (<~1e-3).
    np.testing.assert_allclose(np.asarray(out), np.asarray(ref),
                               atol=2e-2, rtol=2e-2)
    print("KERNEL_OK")
</pallas_src>

<mosaic_0001>
module attributes {stable_mosaic.version = 11 : i64} {
  func.func @_mlp_kernel(%arg0: i32, %arg1: memref<128x32xf32, #tpu.memory_space<vmem>>, %arg2: memref<32x128xf32, #tpu.memory_space<vmem>>, %arg3: memref<1x128xf32, #tpu.memory_space<vmem>>, %arg4: memref<128x32xf32, #tpu.memory_space<vmem>>, %arg5: memref<1x32xf32, #tpu.memory_space<vmem>>, %arg6: memref<128x32xf32, #tpu.memory_space<vmem>>) attributes {dimension_semantics = [#tpu.dimension_semantics<parallel>], iteration_bounds = array<i64: 1>, scalar_prefetch = 0 : i64, scratch_operands = 0 : i64, tpu.core_type = #tpu.core_type<tc>, window_params = [{transform_indices = @transform_0, window_bounds = array<i64: 128, 32>}, {pipeline_mode = #tpu.pipeline_mode<synchronous>, transform_indices = @transform_1, window_bounds = array<i64: 32, 128>}, {pipeline_mode = #tpu.pipeline_mode<synchronous>, transform_indices = @transform_2, window_bounds = array<i64: 1, 128>}, {pipeline_mode = #tpu.pipeline_mode<synchronous>, transform_indices = @transform_3, window_bounds = array<i64: 128, 32>}, {pipeline_mode = #tpu.pipeline_mode<synchronous>, transform_indices = @transform_4, window_bounds = array<i64: 1, 32>}, {transform_indices = @transform_5, window_bounds = array<i64: 128, 32>}]} {
    %c0 = arith.constant 0 : index
    %c0_0 = arith.constant 0 : index
    %0 = vector.load %arg1[%c0, %c0_0] : memref<128x32xf32, #tpu.memory_space<vmem>>, vector<128x32xf32>
    %c0_1 = arith.constant 0 : index
    %c0_2 = arith.constant 0 : index
    %1 = vector.load %arg2[%c0_1, %c0_2] : memref<32x128xf32, #tpu.memory_space<vmem>>, vector<32x128xf32>
    %cst = arith.constant dense<0.000000e+00> : vector<128x128xf32>
    %2 = tpu.matmul %0, %1, %cst {dimension_numbers = #tpu.dot_dimension_numbers<[1], [0], [0], [1], [0, 0, 1, 1], [], []>} : vector<128x32xf32>, vector<32x128xf32>, vector<128x128xf32> -> vector<128x128xf32>
    %c0_3 = arith.constant 0 : index
    %c0_4 = arith.constant 0 : index
    %3 = vector.load %arg3[%c0_3, %c0_4] : memref<1x128xf32, #tpu.memory_space<vmem>>, vector<1x128xf32>
    %4 = vector.broadcast %3 : vector<1x128xf32> to vector<128x128xf32>
    %5 = arith.addf %2, %4 : vector<128x128xf32>
    %cst_5 = arith.constant 5.000000e-01 : f32
    %6 = vector.broadcast %cst_5 : f32 to vector<128x128xf32>
    %7 = arith.mulf %6, %5 : vector<128x128xf32>
    %cst_6 = arith.constant 4.471500e-02 : f32
    %8 = vector.broadcast %cst_6 : f32 to vector<128x128xf32>
    %9 = arith.mulf %8, %5 : vector<128x128xf32>
    %10 = arith.mulf %9, %5 : vector<128x128xf32>
    %11 = arith.mulf %10, %5 : vector<128x128xf32>
    %12 = arith.addf %5, %11 : vector<128x128xf32>
    %cst_7 = arith.constant 0.797884583 : f32
    %13 = vector.broadcast %cst_7 : f32 to vector<128x128xf32>
    %14 = arith.mulf %13, %12 : vector<128x128xf32>
    %15 = math.tanh %14 : vector<128x128xf32>
    %cst_8 = arith.constant 1.000000e+00 : f32
    %16 = vector.broadcast %cst_8 : f32 to vector<128x128xf32>
    %17 = arith.addf %16, %15 : vector<128x128xf32>
    %18 = arith.mulf %7, %17 : vector<128x128xf32>
    %c0_9 = arith.constant 0 : index
    %c0_10 = arith.constant 0 : index
    %19 = vector.load %arg4[%c0_9, %c0_10] : memref<128x32xf32, #tpu.memory_space<vmem>>, vector<128x32xf32>
    %cst_11 = arith.constant dense<0.000000e+00> : vector<128x32xf32>
    %20 = tpu.matmul %18, %19, %cst_11 {dimension_numbers = #tpu.dot_dimension_numbers<[1], [0], [0], [1], [0, 0, 1, 1], [], []>} : vector<128x128xf32>, vector<128x32xf32>, vector<128x32xf32> -> vector<128x32xf32>
    %c0_12 = arith.constant 0 : index
    %c0_13 = arith.constant 0 : index
    %21 = vector.load %arg5[%c0_12, %c0_13] : memref<1x32xf32, #tpu.memory_space<vmem>>, vector<1x32xf32>
    %22 = vector.broadcast %21 : vector<1x32xf32> to vector<128x32xf32>
    %23 = arith.addf %20, %22 : vector<128x32xf32>
    %c0_14 = arith.constant 0 : index
    %c0_15 = arith.constant 0 : index
    %24 = vector.load %arg6[%c0_14, %c0_15] : memref<128x32xf32, #tpu.memory_space<vmem>>, vector<128x32xf32>
    tpu.vector_store %arg6[%c0_14, %c0_15], %23 {strides = array<i32>} : memref<128x32xf32, #tpu.memory_space<vmem>>, vector<128x32xf32>,
    return
  }
  func.func @transform_0(%arg0: i32) -> (i32, i32) {
    %c0_i32 = arith.constant 0 : i32
    %c0_i32_0 = arith.constant 0 : i32
    return %arg0, %c0_i32 : i32, i32
  }
  func.func @transform_1(%arg0: i32) -> (i32, i32) {
    %c0_i32 = arith.constant 0 : i32
    %c0_i32_0 = arith.constant 0 : i32
    %c0_i32_1 = arith.constant 0 : i32
    return %c0_i32, %c0_i32_0 : i32, i32
  }
  func.func @transform_2(%arg0: i32) -> (i32, i32) {
    %c0_i32 = arith.constant 0 : i32
    %c0_i32_0 = arith.constant 0 : i32
    %c0_i32_1 = arith.constant 0 : i32
    return %c0_i32, %c0_i32_0 : i32, i32
  }
  func.func @transform_3(%arg0: i32) -> (i32, i32) {
    %c0_i32 = arith.constant 0 : i32
    %c0_i32_0 = arith.constant 0 : i32
    %c0_i32_1 = arith.constant 0 : i32
    return %c0_i32, %c0_i32_0 : i32, i32
  }
  func.func @transform_4(%arg0: i32) -> (i32, i32) {
    %c0_i32 = arith.constant 0 : i32
    %c0_i32_0 = arith.constant 0 : i32
    %c0_i32_1 = arith.constant 0 : i32
    return %c0_i32, %c0_i32_0 : i32, i32
  }
  func.func @transform_5(%arg0: i32) -> (i32, i32) {
    %c0_i32 = arith.constant 0 : i32
    %c0_i32_0 = arith.constant 0 : i32
    return %arg0, %c0_i32 : i32, i32
  }
}

</mosaic_0001>

<llo_original>
// kernel: tpu_custom_call.1
$region0: #{tpu_custom_call.1}
  #allocation0 [shape = 'u32[]', space=smem, size = 0x4, offset = 0x4, fixed_abs, tag = 'smem constant byte address 0x4 - core index']
  #allocation1 [shape = 'u32[144,128]{1,0:T(1,128)}', space=vmem, size = 0x12000, scoped, tag = 'internal scratch']
  %s0 = inlined_call_operand.vmem [shape: f32[128,32], index: 0, kind: input, shape index: {}]
  %s1 = inlined_call_operand.vmem [shape: f32[32,128], index: 1, kind: input, shape index: {}]
  %s2 = inlined_call_operand.vmem [shape: f32[1,128], index: 2, kind: input, shape index: {}]
  %s3 = inlined_call_operand.vmem [shape: f32[128,32], index: 3, kind: input, shape index: {}]
  %s4 = inlined_call_operand.vmem [shape: f32[1,32], index: 4, kind: input, shape index: {}]
  %s5 = inlined_call_operand.vmem [shape: f32[128,32], index: 5, kind: output, shape index: {}]
  %s6 = sld [smem:[#allocation0]]
  $region30: #{tpu_custom_call.1} parent=0
    _
  %s8 = ssub.s32 1, %s6
  %s9 = scalar_select 0, %s8, %s6
  // Predicated region
  $region2: #{tpu_custom_call.1} parent=0 // pred_check
    _
  $region3: #{tpu_custom_call.1} parent=0 // pred_check_branch
    %11 = sbr.rel (0) target = $region5
  $region4: #{tpu_custom_call.1} parent=0 // pred_region
    _
  $region5: #{tpu_custom_call.1} parent=0 // pred_fallthru
    _
  // Predicated region
  $region6: #{tpu_custom_call.1} parent=0 // pred_check
    _
  $region7: #{tpu_custom_call.1} parent=0 // pred_check_branch
    %13 = sbr.rel (0) target = $region9
  $region8: #{tpu_custom_call.1} parent=0 // pred_region
    _
  $region9: #{tpu_custom_call.1} parent=0 // pred_fallthru
    _
  // Predicated region
  $region10: #{tpu_custom_call.1} parent=0 // pred_check
    _
  $region11: #{tpu_custom_call.1} parent=0 // pred_check_branch
    %15 = sbr.rel (0) target = $region13
  $region12: #{tpu_custom_call.1} parent=0 // pred_region
    _
  $region13: #{tpu_custom_call.1} parent=0 // pred_fallthru
    _
  // Predicated region
  $region14: #{tpu_custom_call.1} parent=0 // pred_check
    _
  $region15: #{tpu_custom_call.1} parent=0 // pred_check_branch
    %17 = sbr.rel (0) target = $region17
  $region16: #{tpu_custom_call.1} parent=0 // pred_region
    _
  $region17: #{tpu_custom_call.1} parent=0 // pred_fallthru
    _
  // Predicated region
  $region18: #{tpu_custom_call.1} parent=0 // pred_check
    _
  $region19: #{tpu_custom_call.1} parent=0 // pred_check_branch
    %19 = sbr.rel (0) target = $region21
  $region20: #{tpu_custom_call.1} parent=0 // pred_region
    _
  $region21: #{tpu_custom_call.1} parent=0 // pred_fallthru
    _
  %v20 = vld [vmem:[%s0] sm:$0xff]
  %v21 = vld [vmem:[%s0 + $0x8] sm:$0xff]
  %v22 = vld [vmem:[%s0 + $0x10] sm:$0xff]
  %v23 = vld [vmem:[%s0 + $0x18] sm:$0xff]
  %v24 = vld [vmem:[%s0 + $0x20] sm:$0xff]
  %v25 = vld [vmem:[%s0 + $0x28] sm:$0xff]
  %v26 = vld [vmem:[%s0 + $0x30] sm:$0xff]
  %v27 = vld [vmem:[%s0 + $0x38] sm:$0xff]
  %v28 = vld [vmem:[%s0 + $0x40] sm:$0xff]
  %v29 = vld [vmem:[%s0 + $0x48] sm:$0xff]
  %v30 = vld [vmem:[%s0 + $0x50] sm:$0xff]
  %v31 = vld [vmem:[%s0 + $0x58] sm:$0xff]
  %v32 = vld [vmem:[%s0 + $0x60] sm:$0xff]
  %v33 = vld [vmem:[%s0 + $0x68] sm:$0xff]
  %v34 = vld [vmem:[%s0 + $0x70] sm:$0xff]
  %v35 = vld [vmem:[%s0 + $0x78] sm:$0xff]
  %v36 = vld [vmem:[%s1] sm:$0xff]
  %v37 = vld [vmem:[%s1 + $0x8] sm:$0xff]
  %v38 = vld [vmem:[%s1 + $0x10] sm:$0xff]
  %v39 = vld [vmem:[%s1 + $0x18] sm:$0xff]
  %v40 = vld [vmem:[%s2] sm:$0x1]
  %v42 = vlaneseq
  %v43 = vshrl.u32 %v42, 7
  %v44 = vsub.s32 0, %v43
  %v45 = vrot.slane %v40, %v44
  %vm47 = vcmask 261120
  %v49 = vsel %vm47, %v20, 0
  %v52 = vsel %vm47, %v21, 0
  %v55 = vsel %vm47, %v22, 0
  %v58 = vsel %vm47, %v23, 0
  %v61 = vsel %vm47, %v24, 0
  %v64 = vsel %vm47, %v25, 0
  %v67 = vsel %vm47, %v26, 0
  %v70 = vsel %vm47, %v27, 0
  %v73 = vsel %vm47, %v28, 0
  %v76 = vsel %vm47, %v29, 0
  %v79 = vsel %vm47, %v30, 0
  %v82 = vsel %vm47, %v31, 0
  %v85 = vsel %vm47, %v32, 0
  %v88 = vsel %vm47, %v33, 0
  %v91 = vsel %vm47, %v34, 0
  %v94 = vsel %vm47, %v35, 0
  %96 = vmatprep.subr.mxu0 0.0
  %97 = vmatpush1.msra.mxu0 0.0
  %98 = vmatprep.subr.mxu0 0.0
  %99 = vmatpush1.msra.mxu0 0.0
  %100 = vmatprep.subr.mxu0 0.0
  %101 = vmatpush1.msra.mxu0 0.0
  %102 = vmatprep.subr.mxu0 0.0
  %103 = vmatpush1.msra.mxu0 0.0
  %104 = vmatprep.subr.mxu0 0.0
  %105 = vmatpush1.msra.mxu0 0.0
  %106 = vmatprep.subr.mxu0 0.0
  %107 = vmatpush1.msra.mxu0 0.0
  %108 = vmatprep.subr.mxu0 0.0
  %109 = vmatpush1.msra.mxu0 0.0
  %110 = vmatprep.subr.mxu0 0.0
  %111 = vmatpush1.msra.mxu0 0.0
  %112 = vmatprep.subr.mxu0 0.0
  %113 = vmatpush1.msra.mxu0 0.0
  %114 = vmatprep.subr.mxu0 0.0
  %115 = vmatpush1.msra.mxu0 0.0
  %116 = vmatprep.subr.mxu0 0.0
  %117 = vmatpush1.msra.mxu0 0.0
  %118 = vmatprep.subr.mxu0 0.0
  %119 = vmatpush1.msra.mxu0 0.0
  %120 = vmatprep.subr.mxu0 0.0
  %121 = vmatpush1.msra.mxu0 %v39
  %122 = vmatprep.subr.mxu0 0.0
  %123 = vmatpush1.msra.mxu0 %v38
  %124 = vmatprep.subr.mxu0 0.0
  %125 = vmatpush1.msra.mxu0 %v37
  %126 = vmatprep.subr.mxu0 0.0
  %127 = vmatpush1.msra.mxu0 %v36
  %128 = vmatprep.subr.mxu0 0.0
  %129 = vmatpush2.msra.mxu0 0.0
  %130 = vmatprep.subr.mxu0 0.0
  %131 = vmatpush2.msra.mxu0 0.0
  %132 = vmatprep.subr.mxu0 0.0
  %133 = vmatpush2.msra.mxu0 0.0
  %134 = vmatprep.subr.mxu0 0.0
  %135 = vmatpush2.msra.mxu0 0.0
  %136 = vmatprep.subr.mxu0 0.0
  %137 = vmatpush2.msra.mxu0 0.0
  %138 = vmatprep.subr.mxu0 0.0
  %139 = vmatpush2.msra.mxu0 0.0
  %140 = vmatprep.subr.mxu0 0.0
  %141 = vmatpush2.msra.mxu0 0.0
  %142 = vmatprep.subr.mxu0 0.0
  %143 = vmatpush2.msra.mxu0 0.0
  %144 = vmatprep.subr.mxu0 0.0
  %145 = vmatpush2.msra.mxu0 0.0
  %146 = vmatprep.subr.mxu0 0.0
  %147 = vmatpush2.msra.mxu0 0.0
  %148 = vmatprep.subr.mxu0 0.0
  %149 = vmatpush2.msra.mxu0 0.0
  %150 = vmatprep.subr.mxu0 0.0
  %151 = vmatpush2.msra.mxu0 0.0
  %152 = vmatprep.subr.mxu0 0.0
  %153 = vmatpush2.msra.mxu0 0.0
  %154 = vmatprep.subr.mxu0 0.0
  %155 = vmatpush2.msra.mxu0 0.0
  %156 = vmatprep.subr.mxu0 0.0
  %157 = vmatpush2.msra.mxu0 0.0
  %158 = vmatprep.subr.mxu0 0.0
  %159 = vmatpush2.msra.mxu0 0.0
  %160 = vmatprep.mubr.f32.mxu0 0.0
  %161 = vmatmul.mubr.f32.gmra.mxu0 %v49
  %v162 = vpop.f32.mrf.mxu0
  %v163 = vadd.f32 %v45, %v162
  %v164 = vpop.f32.mrf.mxu0
  %165 = vmatprep.mubr.f32.mxu0 0.0
  %166 = vmatmul.mubr.f32.gmra.mxu0 %v52
  %v167 = vpop.f32.mrf.mxu0
  %v168 = vadd.f32 %v45, %v167
  %v169 = vpop.f32.mrf.mxu0
  %170 = vmatprep.mubr.f32.mxu0 0.0
  %171 = vmatmul.mubr.f32.gmra.mxu0 %v55
  %v172 = vpop.f32.mrf.mxu0
  %v173 = vadd.f32 %v45, %v172
  %v174 = vpop.f32.mrf.mxu0
  %175 = vmatprep.mubr.f32.mxu0 0.0
  %176 = vmatmul.mubr.f32.gmra.mxu0 %v58
  %v177 = vpop.f32.mrf.mxu0
  %v178 = vadd.f32 %v45, %v177
  %v179 = vpop.f32.mrf.mxu0
  %180 = vmatprep.mubr.f32.mxu0 0.0
  %181 = vmatmul.mubr.f32.gmra.mxu0 %v61
  %v182 = vpop.f32.mrf.mxu0
  %v183 = vadd.f32 %v45, %v182
  %v184 = vpop.f32.mrf.mxu0
  %185 = vmatprep.mubr.f32.mxu0 0.0
  %186 = vmatmul.mubr.f32.gmra.mxu0 %v64
  %v187 = vpop.f32.mrf.mxu0
  %v188 = vadd.f32 %v45, %v187
  %v189 = vpop.f32.mrf.mxu0
  %190 = vmatprep.mubr.f32.mxu0 0.0
  %191 = vmatmul.mubr.f32.gmra.mxu0 %v67
  %v192 = vpop.f32.mrf.mxu0
  %v193 = vadd.f32 %v45, %v192
  %v194 = vpop.f32.mrf.mxu0
  %195 = vmatprep.mubr.f32.mxu0 0.0
  %196 = vmatmul.mubr.f32.gmra.mxu0 %v70
  %v197 = vpop.f32.mrf.mxu0
  %v198 = vadd.f32 %v45, %v197
  %v199 = vpop.f32.mrf.mxu0
  %200 = vmatprep.mubr.f32.mxu0 0.0
  %201 = vmatmul.mubr.f32.gmra.mxu0 %v73
  %v202 = vpop.f32.mrf.mxu0
  %v203 = vadd.f32 %v45, %v202
  %v204 = vpop.f32.mrf.mxu0
  %205 = vmatprep.mubr.f32.mxu0 0.0
  %206 = vmatmul.mubr.f32.gmra.mxu0 %v76
  %v207 = vpop.f32.mrf.mxu0
  %v208 = vadd.f32 %v45, %v207
  %v209 = vpop.f32.mrf.mxu0
  %210 = vmatprep.mubr.f32.mxu0 0.0
  %211 = vmatmul.mubr.f32.gmra.mxu0 %v79
  %v212 = vpop.f32.mrf.mxu0
  %v213 = vadd.f32 %v45, %v212
  %v214 = vpop.f32.mrf.mxu0
  %215 = vmatprep.mubr.f32.mxu0 0.0
  %216 = vmatmul.mubr.f32.gmra.mxu0 %v82
  %v217 = vpop.f32.mrf.mxu0
  %v218 = vadd.f32 %v45, %v217
  %v219 = vpop.f32.mrf.mxu0
  %220 = vmatprep.mubr.f32.mxu0 0.0
  %221 = vmatmul.mubr.f32.gmra.mxu0 %v85
  %v222 = vpop.f32.mrf.mxu0
  %v223 = vadd.f32 %v45, %v222
  %v224 = vpop.f32.mrf.mxu0
  %225 = vmatprep.mubr.f32.mxu0 0.0
  %226 = vmatmul.mubr.f32.gmra.mxu0 %v88
  %v227 = vpop.f32.mrf.mxu0
  %v228 = vadd.f32 %v45, %v227
  %v229 = vpop.f32.mrf.mxu0
  %230 = vmatprep.mubr.f32.mxu0 0.0
  %231 = vmatmul.mubr.f32.gmra.mxu0 %v91
  %v232 = vpop.f32.mrf.mxu0
  %v233 = vadd.f32 %v45, %v232
  %v234 = vpop.f32.mrf.mxu0
  %235 = vmatprep.mubr.f32.mxu0 0.0
  %236 = vmatmul.mubr.f32.gmra.mxu0 %v94
  %v237 = vpop.f32.mrf.mxu0
  %v238 = vadd.f32 %v45, %v237
  %v239 = vpop.f32.mrf.mxu0
  %240 = vdwg.mxu0
  %v241 = vmul.f32 %v163, 0.5
  %v242 = vmul.f32 %v168, 0.5
  %v243 = vmul.f32 %v173, 0.5
  %v244 = vmul.f32 %v178, 0.5
  %v245 = vmul.f32 %v183, 0.5
  %v246 = vmul.f32 %v188, 0.5
  %v247 = vmul.f32 %v193, 0.5
  %v248 = vmul.f32 %v198, 0.5
  %v249 = vmul.f32 %v203, 0.5
  %v250 = vmul.f32 %v208, 0.5
  %v251 = vmul.f32 %v213, 0.5
  %v252 = vmul.f32 %v218, 0.5
  %v253 = vmul.f32 %v223, 0.5
  %v254 = vmul.f32 %v228, 0.5
  %v255 = vmul.f32 %v233, 0.5
  %v256 = vmul.f32 %v238, 0.5
  %v257 = vmul.f32 %v163, 0.044715
  %v258 = vmul.f32 %v168, 0.044715
  %v259 = vmul.f32 %v173, 0.044715
  %v260 = vmul.f32 %v178, 0.044715
  %v261 = vmul.f32 %v183, 0.044715
  %v262 = vmul.f32 %v188, 0.044715
  %v263 = vmul.f32 %v193, 0.044715
  %v264 = vmul.f32 %v198, 0.044715
  %v265 = vmul.f32 %v203, 0.044715
  %v266 = vmul.f32 %v208, 0.044715
  %v267 = vmul.f32 %v213, 0.044715
  %v268 = vmul.f32 %v218, 0.044715
  %v269 = vmul.f32 %v223, 0.044715
  %v270 = vmul.f32 %v228, 0.044715
  %v271 = vmul.f32 %v233, 0.044715
  %v272 = vmul.f32 %v238, 0.044715
  %v273 = vmul.f32 %v257, %v163
  %v274 = vmul.f32 %v258, %v168
  %v275 = vmul.f32 %v259, %v173
  %v276 = vmul.f32 %v260, %v178
  %v277 = vmul.f32 %v261, %v183
  %v278 = vmul.f32 %v262, %v188
  %v279 = vmul.f32 %v263, %v193
  %v280 = vmul.f32 %v264, %v198
  %v281 = vmul.f32 %v265, %v203
  %v282 = vmul.f32 %v266, %v208
  %v283 = vmul.f32 %v267, %v213
  %v284 = vmul.f32 %v268, %v218
  %v285 = vmul.f32 %v269, %v223
  %v286 = vmul.f32 %v270, %v228
  %v287 = vmul.f32 %v271, %v233
  %v288 = vmul.f32 %v272, %v238
  %v289 = vmul.f32 %v273, %v163
  %v290 = vmul.f32 %v274, %v168
  %v291 = vmul.f32 %v275, %v173
  %v292 = vmul.f32 %v276, %v178
  %v293 = vmul.f32 %v277, %v183
  %v294 = vmul.f32 %v278, %v188
  %v295 = vmul.f32 %v279, %v193
  %v296 = vmul.f32 %v280, %v198
  %v297 = vmul.f32 %v281, %v203
  %v298 = vmul.f32 %v282, %v208
  %v299 = vmul.f32 %v283, %v213
  %v300 = vmul.f32 %v284, %v218
  %v301 = vmul.f32 %v285, %v223
  %v302 = vmul.f32 %v286, %v228
  %v303 = vmul.f32 %v287, %v233
  %v304 = vmul.f32 %v288, %v238
  %v305 = vadd.f32 %v163, %v289
  %v306 = vadd.f32 %v168, %v290
  %v307 = vadd.f32 %v173, %v291
  %v308 = vadd.f32 %v178, %v292
  %v309 = vadd.f32 %v183, %v293
  %v310 = vadd.f32 %v188, %v294
  %v311 = vadd.f32 %v193, %v295
  %v312 = vadd.f32 %v198, %v296
  %v313 = vadd.f32 %v203, %v297
  %v314 = vadd.f32 %v208, %v298
  %v315 = vadd.f32 %v213, %v299
  %v316 = vadd.f32 %v218, %v300
  %v317 = vadd.f32 %v223, %v301
  %v318 = vadd.f32 %v228, %v302
  %v319 = vadd.f32 %v233, %v303
  %v320 = vadd.f32 %v238, %v304
  %v321 = vmul.f32 %v305, 0.7978846
  %v322 = vmul.f32 %v306, 0.7978846
  %v323 = vmul.f32 %v307, 0.7978846
  %v324 = vmul.f32 %v308, 0.7978846
  %v325 = vmul.f32 %v309, 0.7978846
  %v326 = vmul.f32 %v310, 0.7978846
  %v327 = vmul.f32 %v311, 0.7978846
  %v328 = vmul.f32 %v312, 0.7978846
  %v329 = vmul.f32 %v313, 0.7978846
  %v330 = vmul.f32 %v314, 0.7978846
  %v331 = vmul.f32 %v315, 0.7978846
  %v332 = vmul.f32 %v316, 0.7978846
  %v333 = vmul.f32 %v317, 0.7978846
  %v334 = vmul.f32 %v318, 0.7978846
  %v335 = vmul.f32 %v319, 0.7978846
  %v336 = vmul.f32 %v320, 0.7978846
  %v337 = vtanh.pop %v321
  %v338 = vtanh.pop %v322
  %v339 = vtanh.pop %v323
  %v340 = vtanh.pop %v324
  %v341 = vtanh.pop %v325
  %v342 = vtanh.pop %v326
  %v343 = vtanh.pop %v327
  %v344 = vtanh.pop %v328
  %v345 = vtanh.pop %v329
  %v346 = vtanh.pop %v330
  %v347 = vtanh.pop %v331
  %v348 = vtanh.pop %v332
  %v349 = vtanh.pop %v333
  %v350 = vtanh.pop %v334
  %v351 = vtanh.pop %v335
  %v352 = vtanh.pop %v336
  %v353 = vadd.f32 %v337, 1.0
  %v354 = vadd.f32 %v338, 1.0
  %v355 = vadd.f32 %v339, 1.0
  %v356 = vadd.f32 %v340, 1.0
  %v357 = vadd.f32 %v341, 1.0
  %v358 = vadd.f32 %v342, 1.0
  %v359 = vadd.f32 %v343, 1.0
  %v360 = vadd.f32 %v344, 1.0
  %v361 = vadd.f32 %v345, 1.0
  %v362 = vadd.f32 %v346, 1.0
  %v363 = vadd.f32 %v347, 1.0
  %v364 = vadd.f32 %v348, 1.0
  %v365 = vadd.f32 %v349, 1.0
  %v366 = vadd.f32 %v350, 1.0
  %v367 = vadd.f32 %v351, 1.0
  %v368 = vadd.f32 %v352, 1.0
  %v369 = vmul.f32 %v241, %v353
  %v370 = vmul.f32 %v242, %v354
  %v371 = vmul.f32 %v243, %v355
  %v372 = vmul.f32 %v244, %v356
  %v373 = vmul.f32 %v245, %v357
  %v374 = vmul.f32 %v246, %v358
  %v375 = vmul.f32 %v247, %v359
  %v376 = vmul.f32 %v248, %v360
  %v377 = vmul.f32 %v249, %v361
  %v378 = vmul.f32 %v250, %v362
  %v379 = vmul.f32 %v251, %v363
  %v380 = vmul.f32 %v252, %v364
  %v381 = vmul.f32 %v253, %v365
  %v382 = vmul.f32 %v254, %v366
  %v383 = vmul.f32 %v255, %v367
  %v384 = vmul.f32 %v256, %v368
  %v385 = vld [vmem:[%s3] sm:$0xff]
  %v386 = vld [vmem:[%s3 + $0x8] sm:$0xff]
  %v387 = vld [vmem:[%s3 + $0x10] sm:$0xff]
  %v388 = vld [vmem:[%s3 + $0x18] sm:$0xff]
  %v389 = vld [vmem:[%s3 + $0x20] sm:$0xff]
  %v390 = vld [vmem:[%s3 + $0x28] sm:$0xff]
  %v391 = vld [vmem:[%s3 + $0x30] sm:$0xff]
  %v392 = vld [vmem:[%s3 + $0x38] sm:$0xff]
  %v393 = vld [vmem:[%s3 + $0x40] sm:$0xff]
  %v394 = vld [vmem:[%s3 + $0x48] sm:$0xff]
  %v395 = vld [vmem:[%s3 + $0x50] sm:$0xff]
  %v396 = vld [vmem:[%s3 + $0x58] sm:$0xff]
  %v397 = vld [vmem:[%s3 + $0x60] sm:$0xff]
  %v398 = vld [vmem:[%s3 + $0x68] sm:$0xff]
  %v399 = vld [vmem:[%s3 + $0x70] sm:$0xff]
  %v400 = vld [vmem:[%s3 + $0x78] sm:$0xff]
  %v401 = vld [vmem:[%s4] sm:$0x1]
  %v403 = vlaneseq
  %v404 = vshrl.u32 %v403, 7
  %v405 = vsub.s32 0, %v404
  %v406 = vrot.slane %v401, %v405
  %408 = vmatprep.subr.mxu0 0.0
  %409 = vmatpush1.msra.mxu0 %v400
  %410 = vmatprep.subr.mxu0 0.0
  %411 = vmatpush1.msra.mxu0 %v399
  %412 = vmatprep.subr.mxu0 0.0
  %413 = vmatpush1.msra.mxu0 %v398
  %414 = vmatprep.subr.mxu0 0.0
  %415 = vmatpush1.msra.mxu0 %v397
  %416 = vmatprep.subr.mxu0 0.0
  %417 = vmatpush1.msra.mxu0 %v396
  %418 = vmatprep.subr.mxu0 0.0
  %419 = vmatpush1.msra.mxu0 %v395
  %420 = vmatprep.subr.mxu0 0.0
  %421 = vmatpush1.msra.mxu0 %v394
  %422 = vmatprep.subr.mxu0 0.0
  %423 = vmatpush1.msra.mxu0 %v393
  %424 = vmatprep.subr.mxu0 0.0
  %425 = vmatpush1.msra.mxu0 %v392
  %426 = vmatprep.subr.mxu0 0.0
  %427 = vmatpush1.msra.mxu0 %v391
  %428 = vmatprep.subr.mxu0 0.0
  %429 = vmatpush1.msra.mxu0 %v390
  %430 = vmatprep.subr.mxu0 0.0
  %431 = vmatpush1.msra.mxu0 %v389
  %432 = vmatprep.subr.mxu0 0.0
  %433 = vmatpush1.msra.mxu0 %v388
  %434 = vmatprep.subr.mxu0 0.0
  %435 = vmatpush1.msra.mxu0 %v387
  %436 = vmatprep.subr.mxu0 0.0
  %437 = vmatpush1.msra.mxu0 %v386
  %438 = vmatprep.subr.mxu0 0.0
  %439 = vmatpush1.msra.mxu0 %v385
  %440 = vmatprep.subr.mxu0 0.0
  %441 = vmatpush2.msra.mxu0 0.0
  %442 = vmatprep.subr.mxu0 0.0
  %443 = vmatpush2.msra.mxu0 0.0
  %444 = vmatprep.subr.mxu0 0.0
  %445 = vmatpush2.msra.mxu0 0.0
  %446 = vmatprep.subr.mxu0 0.0
  %447 = vmatpush2.msra.mxu0 0.0
  %448 = vmatprep.subr.mxu0 0.0
  %449 = vmatpush2.msra.mxu0 0.0
  %450 = vmatprep.subr.mxu0 0.0
  %451 = vmatpush2.msra.mxu0 0.0
  %452 = vmatprep.subr.mxu0 0.0
  %453 = vmatpush2.msra.mxu0 0.0
  %454 = vmatprep.subr.mxu0 0.0
  %455 = vmatpush2.msra.mxu0 0.0
  %456 = vmatprep.subr.mxu0 0.0
  %457 = vmatpush2.msra.mxu0 0.0
  %458 = vmatprep.subr.mxu0 0.0
  %459 = vmatpush2.msra.mxu0 0.0
  %460 = vmatprep.subr.mxu0 0.0
  %461 = vmatpush2.msra.mxu0 0.0
  %462 = vmatprep.subr.mxu0 0.0
  %463 = vmatpush2.msra.mxu0 0.0
  %464 = vmatprep.subr.mxu0 0.0
  %465 = vmatpush2.msra.mxu0 0.0
  %466 = vmatprep.subr.mxu0 0.0
  %467 = vmatpush2.msra.mxu0 0.0
  %468 = vmatprep.subr.mxu0 0.0
  %469 = vmatpush2.msra.mxu0 0.0
  %470 = vmatprep.subr.mxu0 0.0
  %471 = vmatpush2.msra.mxu0 0.0
  %472 = vmatprep.mubr.f32.mxu0 0.0
  %473 = vmatmul.mubr.f32.gmra.mxu0 %v369
  %v474 = vpop.f32.mrf.mxu0
  %v475 = vadd.f32 %v406, %v474
  %v476 = vpop.f32.mrf.mxu0
  %477 = vmatprep.mubr.f32.mxu0 0.0
  %478 = vmatmul.mubr.f32.gmra.mxu0 %v370
  %v479 = vpop.f32.mrf.mxu0
  %v480 = vadd.f32 %v406, %v479
  %v481 = vpop.f32.mrf.mxu0
  %482 = vmatprep.mubr.f32.mxu0 0.0
  %483 = vmatmul.mubr.f32.gmra.mxu0 %v371
  %v484 = vpop.f32.mrf.mxu0
  %v485 = vadd.f32 %v406, %v484
  %v486 = vpop.f32.mrf.mxu0
  %487 = vmatprep.mubr.f32.mxu0 0.0
  %488 = vmatmul.mubr.f32.gmra.mxu0 %v372
  %v489 = vpop.f32.mrf.mxu0
  %v490 = vadd.f32 %v406, %v489
  %v491 = vpop.f32.mrf.mxu0
  %492 = vmatprep.mubr.f32.mxu0 0.0
  %493 = vmatmul.mubr.f32.gmra.mxu0 %v373
  %v494 = vpop.f32.mrf.mxu0
  %v495 = vadd.f32 %v406, %v494
  %v496 = vpop.f32.mrf.mxu0
  %497 = vmatprep.mubr.f32.mxu0 0.0
  %498 = vmatmul.mubr.f32.gmra.mxu0 %v374
  %v499 = vpop.f32.mrf.mxu0
  %v500 = vadd.f32 %v406, %v499
  %v501 = vpop.f32.mrf.mxu0
  %502 = vmatprep.mubr.f32.mxu0 0.0
  %503 = vmatmul.mubr.f32.gmra.mxu0 %v375
  %v504 = vpop.f32.mrf.mxu0
  %v505 = vadd.f32 %v406, %v504
  %v506 = vpop.f32.mrf.mxu0
  %507 = vmatprep.mubr.f32.mxu0 0.0
  %508 = vmatmul.mubr.f32.gmra.mxu0 %v376
  %v509 = vpop.f32.mrf.mxu0
  %v510 = vadd.f32 %v406, %v509
  %v511 = vpop.f32.mrf.mxu0
  %512 = vmatprep.mubr.f32.mxu0 0.0
  %513 = vmatmul.mubr.f32.gmra.mxu0 %v377
  %v514 = vpop.f32.mrf.mxu0
  %v515 = vadd.f32 %v406, %v514
  %v516 = vpop.f32.mrf.mxu0
  %517 = vmatprep.mubr.f32.mxu0 0.0
  %518 = vmatmul.mubr.f32.gmra.mxu0 %v378
  %v519 = vpop.f32.mrf.mxu0
  %v520 = vadd.f32 %v406, %v519
  %v521 = vpop.f32.mrf.mxu0
  %522 = vmatprep.mubr.f32.mxu0 0.0
  %523 = vmatmul.mubr.f32.gmra.mxu0 %v379
  %v524 = vpop.f32.mrf.mxu0
  %v525 = vadd.f32 %v406, %v524
  %v526 = vpop.f32.mrf.mxu0
  %527 = vmatprep.mubr.f32.mxu0 0.0
  %528 = vmatmul.mubr.f32.gmra.mxu0 %v380
  %v529 = vpop.f32.mrf.mxu0
  %v530 = vadd.f32 %v406, %v529
  %v531 = vpop.f32.mrf.mxu0
  %532 = vmatprep.mubr.f32.mxu0 0.0
  %533 = vmatmul.mubr.f32.gmra.mxu0 %v381
  %v534 = vpop.f32.mrf.mxu0
  %v535 = vadd.f32 %v406, %v534
  %v536 = vpop.f32.mrf.mxu0
  %537 = vmatprep.mubr.f32.mxu0 0.0
  %538 = vmatmul.mubr.f32.gmra.mxu0 %v382
  %v539 = vpop.f32.mrf.mxu0
  %v540 = vadd.f32 %v406, %v539
  %v541 = vpop.f32.mrf.mxu0
  %542 = vmatprep.mubr.f32.mxu0 0.0
  %543 = vmatmul.mubr.f32.gmra.mxu0 %v383
  %v544 = vpop.f32.mrf.mxu0
  %v545 = vadd.f32 %v406, %v544
  %v546 = vpop.f32.mrf.mxu0
  %547 = vmatprep.mubr.f32.mxu0 0.0
  %548 = vmatmul.mubr.f32.gmra.mxu0 %v384
  %v549 = vpop.f32.mrf.mxu0
  %v550 = vadd.f32 %v406, %v549
  %v551 = vpop.f32.mrf.mxu0
  %552 = vdwg.mxu0
  %553 = vst.msk [vmem:[%s5] sm:$0xff] %vm47, %v475
  %554 = vst.msk [vmem:[%s5 + $0x8] sm:$0xff] %vm47, %v480
  %555 = vst.msk [vmem:[%s5 + $0x10] sm:$0xff] %vm47, %v485
  %556 = vst.msk [vmem:[%s5 + $0x18] sm:$0xff] %vm47, %v490
  %557 = vst.msk [vmem:[%s5 + $0x20] sm:$0xff] %vm47, %v495
  %558 = vst.msk [vmem:[%s5 + $0x28] sm:$0xff] %vm47, %v500
  %559 = vst.msk [vmem:[%s5 + $0x30] sm:$0xff] %vm47, %v505
  %560 = vst.msk [vmem:[%s5 + $0x38] sm:$0xff] %vm47, %v510
  %561 = vst.msk [vmem:[%s5 + $0x40] sm:$0xff] %vm47, %v515
  %562 = vst.msk [vmem:[%s5 + $0x48] sm:$0xff] %vm47, %v520
  %563 = vst.msk [vmem:[%s5 + $0x50] sm:$0xff] %vm47, %v525
  %564 = vst.msk [vmem:[%s5 + $0x58] sm:$0xff] %vm47, %v530
  %565 = vst.msk [vmem:[%s5 + $0x60] sm:$0xff] %vm47, %v535
  %566 = vst.msk [vmem:[%s5 + $0x68] sm:$0xff] %vm47, %v540
  %567 = vst.msk [vmem:[%s5 + $0x70] sm:$0xff] %vm47, %v545
  %568 = vst.msk [vmem:[%s5 + $0x78] sm:$0xff] %vm47, %v550
  // Predicated region
  $region22: #{tpu_custom_call.1} parent=0 // pred_check
    _
  $region23: #{tpu_custom_call.1} parent=0 // pred_check_branch
    %570 = sbr.rel (0) target = $region25
  $region24: #{tpu_custom_call.1} parent=0 // pred_region
    _
  $region25: #{tpu_custom_call.1} parent=0 // pred_fallthru
    _
  // Predicated region
  $region26: #{tpu_custom_call.1} parent=0 // pred_check
    _
  $region27: #{tpu_custom_call.1} parent=0 // pred_check_branch
    %572 = sbr.rel (0) target = $region29
  $region28: #{tpu_custom_call.1} parent=0 // pred_region
    _
  $region29: #{tpu_custom_call.1} parent=0 // pred_fallthru
    _

</llo_original>
